<compile_context>
chip_gen: v5e
topology: v5e:2x2
jax: 0.10.0
libtpu: 0.0.40
codegen_flags: <defaults>
</compile_context>

<pallas_src>
import jax
import jax.numpy as jnp
from jax.experimental import pallas as pl
from jax.experimental.pallas import tpu as pltpu

H1, H2 = 256, 128     # hidden widths fixed by the module


def _round_up(x, m):
    return ((x + m - 1) // m) * m


def _per_row_vmem_bytes(dim_in, dim_out):
    """Rough tile-dependent VMEM bytes per batch row (double-buffered x/out
    in f32 plus f32/bf16 hidden intermediates)."""
    return (2 * 4 * dim_in            # x f32, 2-deep pipeline
            + 2 * 4 * dim_out         # out f32, 2-deep pipeline
            + 4 * (H1 + H2)           # f32 hidden activations
            + 2 * (dim_in + H1 + H2)) # bf16 casts feeding the MXU


def _pick_tile_b(B, dim_in, dim_out, vmem_tile_budget=16 << 20):
    """Batch tile: as large as possible (amortize ~0.35us/step overhead),
    bounded by a conservative VMEM budget and kept to >=2 grid steps for
    large batches so the v7x megacore split has work on both cores."""
    Bp = _round_up(max(B, 1), 8)
    per_row = _per_row_vmem_bytes(dim_in, dim_out)
    fit = max(8, (vmem_tile_budget // per_row) // 8 * 8)
    if Bp <= 1024:
        return min(Bp, fit)                     # small/medium batch: one or few tiles
    half = _round_up((Bp + 1) // 2, 8)          # keep >= 2 grid steps
    return max(256, min(2048, fit, half))


def prepare_mlp_params(w1, b1, w2, b2, w3, b3):
    """One-time weight prep (hoist out of the per-call path): bf16 weights
    for the MXU, f32 row-vector biases.  Weights stored [in, out]."""
    bf = jnp.bfloat16
    return (w1.astype(bf), b1.reshape(1, -1).astype(jnp.float32),
            w2.astype(bf), b2.reshape(1, -1).astype(jnp.float32),
            w3.astype(bf), b3.reshape(1, -1).astype(jnp.float32))


def mlp_kernel(x_ref, w1_ref, b1_ref, w2_ref, b2_ref, w3_ref, b3_ref, o_ref):
    # Layer 1: cast x to bf16 on the VPU, bf16 x bf16 MXU matmul, f32 acc.
    x = x_ref[...].astype(jnp.bfloat16)
    h = jnp.dot(x, w1_ref[...], preferred_element_type=jnp.float32)
    h = jnp.maximum(h + b1_ref[...], 0.0)
    # Layer 2
    h = jnp.dot(h.astype(jnp.bfloat16), w2_ref[...],
                preferred_element_type=jnp.float32)
    h = jnp.maximum(h + b2_ref[...], 0.0)
    # Dropout (eval mode) -> identity.
    # Layer 3
    out = jnp.dot(h.astype(jnp.bfloat16), w3_ref[...],
                  preferred_element_type=jnp.float32)
    o_ref[...] = (out + b3_ref[...]).astype(o_ref.dtype)


def mlp_forward(x, params, *, tile_b=None):
    """x: [B, dim_in] f32.  params: output of prepare_mlp_params."""
    w1, b1, w2, b2, w3, b3 = params
    B, dim_in = x.shape
    dim_out = w3.shape[1]
    out_dtype = x.dtype

    if tile_b is None:
        tile_b = _pick_tile_b(B, dim_in, dim_out)
    Bp = _round_up(max(B, 1), tile_b)

    # Batch padding only when needed (no K / N padding: blocks equal full dims).
    x_p = x if Bp == B else jnp.zeros((Bp, dim_in), x.dtype).at[:B, :].set(x)

    grid = (Bp // tile_b,)

    # Weights / biases: same block every step -> VMEM-resident across the grid.
    resident = lambda shape: pl.BlockSpec(shape, lambda i: (0, 0))

    flops = 2 * Bp * (dim_in * H1 + H1 * H2 + H2 * dim_out)
    bytes_accessed = (
        Bp * dim_in * 4                                   # f32 x read
        + (w1.size + w2.size + w3.size) * 2               # bf16 weights
        + (b1.size + b2.size + b3.size) * 4               # f32 biases
        + Bp * dim_out * 4                                # f32 output write
    )

    # Explicit VMEM budget: tile-dependent bytes + resident weights + slack,
    # clamped so it is safe on v7x (64 MiB physical) and above v5e's 16 MiB default.
    tile_bytes = tile_b * _per_row_vmem_bytes(dim_in, dim_out)
    weight_bytes = 2 * (dim_in * H1 + H1 * H2 + H2 * dim_out) + 4 * (H1 + H2 + dim_out)
    vmem_limit = int(min(48 << 20,
                         max(32 << 20, 3 * tile_bytes + weight_bytes + (4 << 20))))

    out_p = pl.pallas_call(
        mlp_kernel,
        out_shape=jax.ShapeDtypeStruct((Bp, dim_out), out_dtype),
        grid=grid,
        in_specs=[
            pl.BlockSpec((tile_b, dim_in), lambda i: (i, 0)),   # x: tiled over batch
            resident((dim_in, H1)),
            resident((1, H1)),
            resident((H1, H2)),
            resident((1, H2)),
            resident((H2, dim_out)),
            resident((1, dim_out)),
        ],
        out_specs=pl.BlockSpec((tile_b, dim_out), lambda i: (i, 0)),
        compiler_params=pltpu.CompilerParams(
            dimension_semantics=("parallel",),   # v7x: shard batch tiles over 2 TCs
            vmem_limit_bytes=vmem_limit,
        ),
        cost_estimate=pl.CostEstimate(
            flops=flops, transcendentals=0, bytes_accessed=bytes_accessed),
    )(x_p, w1, b1, w2, b2, w3, b3)

    return out_p if Bp == B else out_p[:B]


def reference_forward_bf16(x, w1, b1, w2, b2, w3, b3):
    """Mimics the kernel's bf16-input / f32-accumulate numerics."""
    bf = jnp.bfloat16
    h = jnp.dot(x.astype(bf), w1.astype(bf),
                preferred_element_type=jnp.float32) + b1
    h = jnp.maximum(h, 0.0)
    h = jnp.dot(h.astype(bf), w2.astype(bf),
                preferred_element_type=jnp.float32) + b2
    h = jnp.maximum(h, 0.0)
    return jnp.dot(h.astype(bf), w3.astype(bf),
                   preferred_element_type=jnp.float32) + b3


def reference_forward_f32(x, w1, b1, w2, b2, w3, b3):
    h = jnp.maximum(x @ w1 + b1, 0.0)
    h = jnp.maximum(h @ w2 + b2, 0.0)
    return h @ w3 + b3


if __name__ == "__main__":
    # Small shapes consistent with the module's forward: flat features in/out.
    B, dim_in, dim_out = 8, 32, 16

    key = jax.random.PRNGKey(0)
    k = jax.random.split(key, 8)

    # Deterministic parameter init (uniform, PyTorch-Linear-like scale).
    def init_linear(kw, kb, fan_in, fan_out):
        bound = 1.0 / (fan_in ** 0.5)
        w = jax.random.uniform(kw, (fan_in, fan_out), jnp.float32, -bound, bound)
        b = jax.random.uniform(kb, (fan_out,), jnp.float32, -bound, bound)
        return w, b

    x = jax.random.normal(k[0], (B, dim_in), jnp.float32)
    w1, b1 = init_linear(k[1], k[2], dim_in, H1)
    w2, b2 = init_linear(k[3], k[4], H1, H2)
    w3, b3 = init_linear(k[5], k[6], H2, dim_out)

    # One-time weight prep (hoisted out of the per-call path).
    params = prepare_mlp_params(w1, b1, w2, b2, w3, b3)

    fwd = jax.jit(mlp_forward)
    out = jax.block_until_ready(fwd(x, params))
    assert out.shape == (B, dim_out)

    # Check against a reference with matching bf16-in / f32-accumulate numerics.
    ref_bf16 = reference_forward_bf16(x, w1, b1, w2, b2, w3, b3)
    assert jnp.allclose(out, ref_bf16, atol=1e-2, rtol=1e-2), "mismatch vs bf16 reference"

    # Sanity check against pure-f32 math (looser tolerance for bf16 inputs).
    ref_f32 = reference_forward_f32(x, w1, b1, w2, b2, w3, b3)
    assert jnp.allclose(out, ref_f32, atol=5e-2, rtol=5e-2), "mismatch vs f32 reference"

    # Exercise the batch-padding / slicing path (B not a multiple of 8).
    B2 = 300
    x2 = jax.random.normal(k[7], (B2, dim_in), jnp.float32)
    out2 = jax.block_until_ready(fwd(x2, params))
    ref2 = reference_forward_bf16(x2, w1, b1, w2, b2, w3, b3)
    assert out2.shape == (B2, dim_out)
    assert jnp.allclose(out2, ref2, atol=1e-2, rtol=1e-2), "mismatch on padded batch"

    print("KERNEL_OK")
</pallas_src>

<mosaic_0001>
module attributes {stable_mosaic.version = 11 : i64} {
  func.func @mlp_kernel(%arg0: i32, %arg1: memref<8x32xf32, #tpu.memory_space<vmem>>, %arg2: memref<32x256xbf16, #tpu.memory_space<vmem>>, %arg3: memref<1x256xf32, #tpu.memory_space<vmem>>, %arg4: memref<256x128xbf16, #tpu.memory_space<vmem>>, %arg5: memref<1x128xf32, #tpu.memory_space<vmem>>, %arg6: memref<128x16xbf16, #tpu.memory_space<vmem>>, %arg7: memref<1x16xf32, #tpu.memory_space<vmem>>, %arg8: memref<8x16xf32, #tpu.memory_space<vmem>>) attributes {dimension_semantics = [#tpu.dimension_semantics<parallel>], iteration_bounds = array<i64: 1>, scalar_prefetch = 0 : i64, scratch_operands = 0 : i64, tpu.core_type = #tpu.core_type<tc>, window_params = [{transform_indices = @transform_0, window_bounds = array<i64: 8, 32>}, {pipeline_mode = #tpu.pipeline_mode<synchronous>, transform_indices = @transform_1, window_bounds = array<i64: 32, 256>}, {pipeline_mode = #tpu.pipeline_mode<synchronous>, transform_indices = @transform_2, window_bounds = array<i64: 1, 256>}, {pipeline_mode = #tpu.pipeline_mode<synchronous>, transform_indices = @transform_3, window_bounds = array<i64: 256, 128>}, {pipeline_mode = #tpu.pipeline_mode<synchronous>, transform_indices = @transform_4, window_bounds = array<i64: 1, 128>}, {pipeline_mode = #tpu.pipeline_mode<synchronous>, transform_indices = @transform_5, window_bounds = array<i64: 128, 16>}, {pipeline_mode = #tpu.pipeline_mode<synchronous>, transform_indices = @transform_6, window_bounds = array<i64: 1, 16>}, {transform_indices = @transform_7, window_bounds = array<i64: 8, 16>}]} {
    %c0 = arith.constant 0 : index
    %c0_0 = arith.constant 0 : index
    %0 = vector.load %arg1[%c0, %c0_0] : memref<8x32xf32, #tpu.memory_space<vmem>>, vector<8x32xf32>
    %1 = arith.truncf %0 : vector<8x32xf32> to vector<8x32xbf16>
    %c0_1 = arith.constant 0 : index
    %c0_2 = arith.constant 0 : index
    %2 = vector.load %arg2[%c0_1, %c0_2] : memref<32x256xbf16, #tpu.memory_space<vmem>>, vector<32x256xbf16>
    %cst = arith.constant dense<0.000000e+00> : vector<8x256xf32>
    %3 = tpu.matmul %1, %2, %cst {dimension_numbers = #tpu.dot_dimension_numbers<[1], [0], [0], [1], [0, 0, 1, 1], [], []>} : vector<8x32xbf16>, vector<32x256xbf16>, vector<8x256xf32> -> vector<8x256xf32>
    %c0_3 = arith.constant 0 : index
    %c0_4 = arith.constant 0 : index
    %4 = vector.load %arg3[%c0_3, %c0_4] : memref<1x256xf32, #tpu.memory_space<vmem>>, vector<1x256xf32>
    %5 = vector.broadcast %4 : vector<1x256xf32> to vector<8x256xf32>
    %6 = arith.addf %3, %5 : vector<8x256xf32>
    %cst_5 = arith.constant 0.000000e+00 : f32
    %7 = vector.broadcast %cst_5 : f32 to vector<8x256xf32>
    %8 = arith.maximumf %6, %7 : vector<8x256xf32>
    %9 = arith.truncf %8 : vector<8x256xf32> to vector<8x256xbf16>
    %c0_6 = arith.constant 0 : index
    %c0_7 = arith.constant 0 : index
    %10 = vector.load %arg4[%c0_6, %c0_7] : memref<256x128xbf16, #tpu.memory_space<vmem>>, vector<256x128xbf16>
    %cst_8 = arith.constant dense<0.000000e+00> : vector<8x128xf32>
    %11 = tpu.matmul %9, %10, %cst_8 {dimension_numbers = #tpu.dot_dimension_numbers<[1], [0], [0], [1], [0, 0, 1, 1], [], []>} : vector<8x256xbf16>, vector<256x128xbf16>, vector<8x128xf32> -> vector<8x128xf32>
    %c0_9 = arith.constant 0 : index
    %c0_10 = arith.constant 0 : index
    %12 = vector.load %arg5[%c0_9, %c0_10] : memref<1x128xf32, #tpu.memory_space<vmem>>, vector<1x128xf32>
    %13 = vector.broadcast %12 : vector<1x128xf32> to vector<8x128xf32>
    %14 = arith.addf %11, %13 : vector<8x128xf32>
    %cst_11 = arith.constant 0.000000e+00 : f32
    %15 = vector.broadcast %cst_11 : f32 to vector<8x128xf32>
    %16 = arith.maximumf %14, %15 : vector<8x128xf32>
    %17 = arith.truncf %16 : vector<8x128xf32> to vector<8x128xbf16>
    %c0_12 = arith.constant 0 : index
    %c0_13 = arith.constant 0 : index
    %18 = vector.load %arg6[%c0_12, %c0_13] : memref<128x16xbf16, #tpu.memory_space<vmem>>, vector<128x16xbf16>
    %cst_14 = arith.constant dense<0.000000e+00> : vector<8x16xf32>
    %19 = tpu.matmul %17, %18, %cst_14 {dimension_numbers = #tpu.dot_dimension_numbers<[1], [0], [0], [1], [0, 0, 1, 1], [], []>} : vector<8x128xbf16>, vector<128x16xbf16>, vector<8x16xf32> -> vector<8x16xf32>
    %c0_15 = arith.constant 0 : index
    %c0_16 = arith.constant 0 : index
    %20 = vector.load %arg7[%c0_15, %c0_16] : memref<1x16xf32, #tpu.memory_space<vmem>>, vector<1x16xf32>
    %21 = vector.broadcast %20 : vector<1x16xf32> to vector<8x16xf32>
    %22 = arith.addf %19, %21 : vector<8x16xf32>
    %c0_17 = arith.constant 0 : index
    %c0_18 = arith.constant 0 : index
    %23 = vector.load %arg8[%c0_17, %c0_18] : memref<8x16xf32, #tpu.memory_space<vmem>>, vector<8x16xf32>
    tpu.vector_store %arg8[%c0_17, %c0_18], %22 {strides = array<i32>} : memref<8x16xf32, #tpu.memory_space<vmem>>, vector<8x16xf32>,
    return
  }
  func.func @transform_0(%arg0: i32) -> (i32, i32) {
    %c0_i32 = arith.constant 0 : i32
    %c0_i32_0 = arith.constant 0 : i32
    return %arg0, %c0_i32 : i32, i32
  }
  func.func @transform_1(%arg0: i32) -> (i32, i32) {
    %c0_i32 = arith.constant 0 : i32
    %c0_i32_0 = arith.constant 0 : i32
    %c0_i32_1 = arith.constant 0 : i32
    return %c0_i32, %c0_i32_0 : i32, i32
  }
  func.func @transform_2(%arg0: i32) -> (i32, i32) {
    %c0_i32 = arith.constant 0 : i32
    %c0_i32_0 = arith.constant 0 : i32
    %c0_i32_1 = arith.constant 0 : i32
    return %c0_i32, %c0_i32_0 : i32, i32
  }
  func.func @transform_3(%arg0: i32) -> (i32, i32) {
    %c0_i32 = arith.constant 0 : i32
    %c0_i32_0 = arith.constant 0 : i32
    %c0_i32_1 = arith.constant 0 : i32
    return %c0_i32, %c0_i32_0 : i32, i32
  }
  func.func @transform_4(%arg0: i32) -> (i32, i32) {
    %c0_i32 = arith.constant 0 : i32
    %c0_i32_0 = arith.constant 0 : i32
    %c0_i32_1 = arith.constant 0 : i32
    return %c0_i32, %c0_i32_0 : i32, i32
  }
  func.func @transform_5(%arg0: i32) -> (i32, i32) {
    %c0_i32 = arith.constant 0 : i32
    %c0_i32_0 = arith.constant 0 : i32
    %c0_i32_1 = arith.constant 0 : i32
    return %c0_i32, %c0_i32_0 : i32, i32
  }
  func.func @transform_6(%arg0: i32) -> (i32, i32) {
    %c0_i32 = arith.constant 0 : i32
    %c0_i32_0 = arith.constant 0 : i32
    %c0_i32_1 = arith.constant 0 : i32
    return %c0_i32, %c0_i32_0 : i32, i32
  }
  func.func @transform_7(%arg0: i32) -> (i32, i32) {
    %c0_i32 = arith.constant 0 : i32
    %c0_i32_0 = arith.constant 0 : i32
    return %arg0, %c0_i32 : i32, i32
  }
}

</mosaic_0001>

<llo_original>
// kernel: mlp_forward.1
$region0: #{mlp_forward.1}
  #allocation0 [shape = 'u32[]', space=smem, size = 0x4, offset = 0x4, fixed_abs, tag = 'smem constant byte address 0x4 - core index']
  #allocation1 [shape = 'u32[72,128]{1,0:T(1,128)}', space=vmem, size = 0x9000, scoped, tag = 'internal scratch']
  %s0 = inlined_call_operand.vmem [shape: f32[8,32], index: 0, kind: input, shape index: {}]
  %s1 = inlined_call_operand.vmem [shape: bf16[32,256], index: 1, kind: input, shape index: {}]
  %s2 = inlined_call_operand.vmem [shape: f32[1,256], index: 2, kind: input, shape index: {}]
  %s3 = inlined_call_operand.hbm [shape: bf16[256,128], index: 3, kind: input, shape index: {}]
  %s4 = inlined_call_operand.vmem [shape: f32[1,128], index: 4, kind: input, shape index: {}]
  %s5 = inlined_call_operand.vmem [shape: bf16[128,16], index: 5, kind: input, shape index: {}]
  %s6 = inlined_call_operand.vmem [shape: f32[1,16], index: 6, kind: input, shape index: {}]
  %s7 = inlined_call_operand.hbm [shape: f32[8,16], index: 7, kind: output, shape index: {}]
  %s8 = sld [smem:[#allocation0]]
  $region42: #{mlp_forward.1} parent=0
    _
  %s10 = ssub.s32 1, %s8
  %s11 = scalar_select 0, %s10, %s8
  $region1: #{mlp_forward.1} parent=0
    #allocation2 [shape = 'u8[65536]{0}', space=vmem, size = 0x10000, scoped, tag = 'input window, operand 3, single buffered']
    #allocation3 [shape = 's32[1]{0}', space=sflag, size = 0x4, scoped, tag = 'scoped memory for mlp_forward.1']
    #allocation4 [shape = 's32[1]{0}', space=sflag, size = 0x4, scoped, tag = 'scoped memory for mlp_forward.1']
    #allocation5 [shape = 'u8[4096]{0}', space=vmem, size = 0x1000, scoped, tag = 'output window, operand 0, single buffered']
    %12 = vsyncpa [#allocation3], 0
    %13 = vsyncpa [#allocation4], 0
    // Predicated region
    $region2: #{mlp_forward.1} parent=1 // pred_check
      _
    $region3: #{mlp_forward.1} parent=1 // pred_check_branch
      %15 = sbr.rel (0) target = $region5
    $region4: #{mlp_forward.1} parent=1 // pred_region
      _
    $region5: #{mlp_forward.1} parent=1 // pred_fallthru
      _
    // Predicated region
    $region6: #{mlp_forward.1} parent=1 // pred_check
      _
    $region7: #{mlp_forward.1} parent=1 // pred_check_branch
      %17 = sbr.rel (0) target = $region9
    $region8: #{mlp_forward.1} parent=1 // pred_region
      _
    $region9: #{mlp_forward.1} parent=1 // pred_fallthru
      _
    // Predicated region
    $region10: #{mlp_forward.1} parent=1 // pred_check
      _
    $region11: #{mlp_forward.1} parent=1 // pred_check_branch
      %19 = sbr.rel (0) target = $region13
    $region12: #{mlp_forward.1} parent=1 // pred_region
      _
    $region13: #{mlp_forward.1} parent=1 // pred_fallthru
      _
    // Predicated region
    $region14: #{mlp_forward.1} parent=1 // pred_check
      _
    $region15: #{mlp_forward.1} parent=1 // pred_check_branch
      %21 = sbr.rel (0) target = $region17
    $region16: #{mlp_forward.1} parent=1 // pred_region
      %23 = vsyncadd [#allocation3], 0
      %s24 = sshll.u32 %s3, 4
      %s25 = int_to_ptr.hbm [resolvable:$true] %s24
      %s26 = sshll.u32 [#allocation2], 4
      %s27 = int_to_ptr.vmem [resolvable:$true] %s26
      %32 = dma.hbm_to_vmem [thread:$0]  %s25, 2048, %s27, [#allocation3], 64, 64, 4
    $region17: #{mlp_forward.1} parent=1 // pred_fallthru
      _
    // Predicated region
    $region18: #{mlp_forward.1} parent=1 // pred_check
      _
    $region19: #{mlp_forward.1} parent=1 // pred_check_branch
      %34 = sbr.rel (0) target = $region21
    $region20: #{mlp_forward.1} parent=1 // pred_region
      _
    $region21: #{mlp_forward.1} parent=1 // pred_fallthru
      _
    // Predicated region
    $region22: #{mlp_forward.1} parent=1 // pred_check
      _
    $region23: #{mlp_forward.1} parent=1 // pred_check_branch
      %36 = sbr.rel (0) target = $region25
    $region24: #{mlp_forward.1} parent=1 // pred_region
      _
    $region25: #{mlp_forward.1} parent=1 // pred_fallthru
      _
    // Predicated region
    $region26: #{mlp_forward.1} parent=1 // pred_check
      _
    $region27: #{mlp_forward.1} parent=1 // pred_check_branch
      %38 = sbr.rel (0) target = $region29
    $region28: #{mlp_forward.1} parent=1 // pred_region
      _
    $region29: #{mlp_forward.1} parent=1 // pred_fallthru
      _
    // Predicated region
    $region30: #{mlp_forward.1} parent=1 // pred_check
      _
    $region31: #{mlp_forward.1} parent=1 // pred_check_branch
      %40 = sbr.rel (0) target = $region33
    $region32: #{mlp_forward.1} parent=1 // pred_region
      %42 = dma.done [#allocation3], 2048
    $region33: #{mlp_forward.1} parent=1 // pred_fallthru
      _
    %v44 = vld [vmem:[%s0] sm:$0xff]
    %v45 = vpack.c.bf16 %v44, %v44
    %v46 = vld [vmem:[%s1] sm:$0xff]
    %v47 = vld [vmem:[%s1 + $0x8] sm:$0xff]
    %v48 = vld [vmem:[%s1 + $0x10] sm:$0xff]
    %v49 = vld [vmem:[%s1 + $0x18] sm:$0xff]
    %v50 = vld [vmem:[%s2] sm:$0x3]
    %v52 = vperm.slane %v50, 0
    %v53 = vperm.slane %v50, 1
    %v60 = vunpack.c.l.b16 %v46
    %v61 = vunpack.c.h.b16 %v46
    %v62 = vunpack.c.l.b16 %v47
    %v63 = vunpack.c.h.b16 %v47
    %v64 = vunpack.c.l.b16 %v48
    %v65 = vunpack.c.h.b16 %v48
    %v66 = vunpack.c.l.b16 %v49
    %v67 = vunpack.c.h.b16 %v49
    %v68 = vpack.c.b16 %v62, %v60
    %v69 = vpack.c.b16 %v63, %v61
    %v70 = vpack.c.b16 %v66, %v64
    %v71 = vpack.c.b16 %v67, %v65
    %vm76 = vcmask 261120
    %v78 = vsel %vm76, %v45, 0
    %80 = vmatpush.bf16.msra.mxu0 0
    %81 = vmatpush.bf16.msra.mxu0 0
    %82 = vmatpush.bf16.msra.mxu0 0
    %83 = vmatpush.bf16.msra.mxu0 0
    %84 = vmatpush.bf16.msra.mxu0 0
    %85 = vmatpush.bf16.msra.mxu0 0
    %86 = vmatpush.bf16.msra.mxu0 %v70
    %87 = vmatpush.bf16.msra.mxu0 %v68
    %88 = vmatmul.bf16.gmra.mxu0 %v78
    %v89 = vpop.f32.mrf.mxu0
    %v90 = vadd.f32 %v52, %v89
    %v91 = vpop.f32.mrf.mxu0
    %92 = vdwg.mxu0
    %93 = vmatpush.bf16.msra.mxu0 0
    %94 = vmatpush.bf16.msra.mxu0 0
    %95 = vmatpush.bf16.msra.mxu0 0
    %96 = vmatpush.bf16.msra.mxu0 0
    %97 = vmatpush.bf16.msra.mxu0 0
    %98 = vmatpush.bf16.msra.mxu0 0
    %99 = vmatpush.bf16.msra.mxu0 %v71
    %100 = vmatpush.bf16.msra.mxu0 %v69
    %101 = vmatmul.bf16.gmra.mxu0 %v78
    %v102 = vpop.f32.mrf.mxu0
    %v103 = vadd.f32 %v53, %v102
    %v104 = vpop.f32.mrf.mxu0
    %105 = vdwg.mxu0
    %v106 = vmax.f32 %v90, 0.0
    %v107 = vmax.f32 %v103, 0.0
    %v108 = vpack.c.bf16 %v106, %v106
    %v109 = vpack.c.bf16 %v107, %v107
    %v110 = vld [vmem:[#allocation2] sm:$0xf]
    %v111 = vld [vmem:[#allocation2 + $0x4] sm:$0xf]
    %v112 = vld [vmem:[#allocation2 + $0x8] sm:$0xf]
    %v113 = vld [vmem:[#allocation2 + $0xc] sm:$0xf]
    %v114 = vld [vmem:[#allocation2 + $0x10] sm:$0xf]
    %v115 = vld [vmem:[#allocation2 + $0x14] sm:$0xf]
    %v116 = vld [vmem:[#allocation2 + $0x18] sm:$0xf]
    %v117 = vld [vmem:[#allocation2 + $0x1c] sm:$0xf]
    %v118 = vld [vmem:[#allocation2 + $0x20] sm:$0xf]
    %v119 = vld [vmem:[#allocation2 + $0x24] sm:$0xf]
    %v120 = vld [vmem:[#allocation2 + $0x28] sm:$0xf]
    %v121 = vld [vmem:[#allocation2 + $0x2c] sm:$0xf]
    %v122 = vld [vmem:[#allocation2 + $0x30] sm:$0xf]
    %v123 = vld [vmem:[#allocation2 + $0x34] sm:$0xf]
    %v124 = vld [vmem:[#allocation2 + $0x38] sm:$0xf]
    %v125 = vld [vmem:[#allocation2 + $0x3c] sm:$0xf]
    %v126 = vld [vmem:[#allocation2 + $0x40] sm:$0xf]
    %v127 = vld [vmem:[#allocation2 + $0x44] sm:$0xf]
    %v128 = vld [vmem:[#allocation2 + $0x48] sm:$0xf]
    %v129 = vld [vmem:[#allocation2 + $0x4c] sm:$0xf]
    %v130 = vld [vmem:[#allocation2 + $0x50] sm:$0xf]
    %v131 = vld [vmem:[#allocation2 + $0x54] sm:$0xf]
    %v132 = vld [vmem:[#allocation2 + $0x58] sm:$0xf]
    %v133 = vld [vmem:[#allocation2 + $0x5c] sm:$0xf]
    %v134 = vld [vmem:[#allocation2 + $0x60] sm:$0xf]
    %v135 = vld [vmem:[#allocation2 + $0x64] sm:$0xf]
    %v136 = vld [vmem:[#allocation2 + $0x68] sm:$0xf]
    %v137 = vld [vmem:[#allocation2 + $0x6c] sm:$0xf]
    %v138 = vld [vmem:[#allocation2 + $0x70] sm:$0xf]
    %v139 = vld [vmem:[#allocation2 + $0x74] sm:$0xf]
    %v140 = vld [vmem:[#allocation2 + $0x78] sm:$0xf]
    %v141 = vld [vmem:[#allocation2 + $0x7c] sm:$0xf]
    %v142 = vld [vmem:[%s4] sm:$0x1]
    %v144 = vperm.slane %v142, 0
    %v178 = vunpack.c.l.b16 %v110
    %v179 = vunpack.c.l.b16 %v111
    %v180 = vunpack.c.l.b16 %v112
    %v181 = vunpack.c.l.b16 %v113
    %v182 = vunpack.c.l.b16 %v114
    %v183 = vunpack.c.l.b16 %v115
    %v184 = vunpack.c.l.b16 %v116
    %v185 = vunpack.c.l.b16 %v117
    %v186 = vunpack.c.l.b16 %v118
    %v187 = vunpack.c.l.b16 %v119
    %v188 = vunpack.c.l.b16 %v120
    %v189 = vunpack.c.l.b16 %v121
    %v190 = vunpack.c.l.b16 %v122
    %v191 = vunpack.c.l.b16 %v123
    %v192 = vunpack.c.l.b16 %v124
    %v193 = vunpack.c.l.b16 %v125
    %v194 = vunpack.c.l.b16 %v126
    %v195 = vunpack.c.l.b16 %v127
    %v196 = vunpack.c.l.b16 %v128
    %v197 = vunpack.c.l.b16 %v129
    %v198 = vunpack.c.l.b16 %v130
    %v199 = vunpack.c.l.b16 %v131
    %v200 = vunpack.c.l.b16 %v132
    %v201 = vunpack.c.l.b16 %v133
    %v202 = vunpack.c.l.b16 %v134
    %v203 = vunpack.c.l.b16 %v135
    %v204 = vunpack.c.l.b16 %v136
    %v205 = vunpack.c.l.b16 %v137
    %v206 = vunpack.c.l.b16 %v138
    %v207 = vunpack.c.l.b16 %v139
    %v208 = vunpack.c.l.b16 %v140
    %v209 = vunpack.c.l.b16 %v141
    %v210 = vpack.c.b16 %v179, %v178
    %v211 = vpack.c.b16 %v181, %v180
    %v212 = vpack.c.b16 %v183, %v182
    %v213 = vpack.c.b16 %v185, %v184
    %v214 = vpack.c.b16 %v187, %v186
    %v215 = vpack.c.b16 %v189, %v188
    %v216 = vpack.c.b16 %v191, %v190
    %v217 = vpack.c.b16 %v193, %v192
    %v218 = vpack.c.b16 %v195, %v194
    %v219 = vpack.c.b16 %v197, %v196
    %v220 = vpack.c.b16 %v199, %v198
    %v221 = vpack.c.b16 %v201, %v200
    %v222 = vpack.c.b16 %v203, %v202
    %v223 = vpack.c.b16 %v205, %v204
    %v224 = vpack.c.b16 %v207, %v206
    %v225 = vpack.c.b16 %v209, %v208
    %242 = vmatpush.bf16.msra.mxu0 %v217
    %243 = vmatpush.bf16.msra.mxu0 %v216
    %244 = vmatpush.bf16.msra.mxu0 %v215
    %245 = vmatpush.bf16.msra.mxu0 %v214
    %246 = vmatpush.bf16.msra.mxu0 %v213
    %247 = vmatpush.bf16.msra.mxu0 %v212
    %248 = vmatpush.bf16.msra.mxu0 %v211
    %249 = vmatpush.bf16.msra.mxu0 %v210
    %250 = vmatmul.bf16.gmra.mxu0 %v108
    %v251 = vpop.f32.mrf.mxu0
    %v252 = vadd.f32 %v144, %v251
    %v253 = vpop.f32.mrf.mxu0
    %254 = vdwg.mxu0
    %255 = vmatpush.bf16.msra.mxu0 %v225
    %256 = vmatpush.bf16.msra.mxu0 %v224
    %257 = vmatpush.bf16.msra.mxu0 %v223
    %258 = vmatpush.bf16.msra.mxu0 %v222
    %259 = vmatpush.bf16.msra.mxu0 %v221
    %260 = vmatpush.bf16.msra.mxu0 %v220
    %261 = vmatpush.bf16.msra.mxu0 %v219
    %262 = vmatpush.bf16.msra.mxu0 %v218
    %263 = vmatmul.bf16.gmra.mxu0 %v109
    %v264 = vpop.f32.mrf.mxu0
    %v265 = vadd.f32 %v252, %v264
    %v266 = vpop.f32.mrf.mxu0
    %267 = vdwg.mxu0
    %v268 = vmax.f32 %v265, 0.0
    %v269 = vpack.c.bf16 %v268, %v268
    %v270 = vld [vmem:[%s5] sm:$0xf]
    %v271 = vld [vmem:[%s5 + $0x4] sm:$0xf]
    %v272 = vld [vmem:[%s5 + $0x8] sm:$0xf]
    %v273 = vld [vmem:[%s5 + $0xc] sm:$0xf]
    %v274 = vld [vmem:[%s5 + $0x10] sm:$0xf]
    %v275 = vld [vmem:[%s5 + $0x14] sm:$0xf]
    %v276 = vld [vmem:[%s5 + $0x18] sm:$0xf]
    %v277 = vld [vmem:[%s5 + $0x1c] sm:$0xf]
    %v278 = vld [vmem:[%s5 + $0x20] sm:$0xf]
    %v279 = vld [vmem:[%s5 + $0x24] sm:$0xf]
    %v280 = vld [vmem:[%s5 + $0x28] sm:$0xf]
    %v281 = vld [vmem:[%s5 + $0x2c] sm:$0xf]
    %v282 = vld [vmem:[%s5 + $0x30] sm:$0xf]
    %v283 = vld [vmem:[%s5 + $0x34] sm:$0xf]
    %v284 = vld [vmem:[%s5 + $0x38] sm:$0xf]
    %v285 = vld [vmem:[%s5 + $0x3c] sm:$0xf]
    %v286 = vld [vmem:[%s6] sm:$0x1]
    %v288 = vperm.slane %v286, 0
    %v306 = vunpack.c.l.b16 %v270
    %v307 = vunpack.c.l.b16 %v271
    %v308 = vunpack.c.l.b16 %v272
    %v309 = vunpack.c.l.b16 %v273
    %v310 = vunpack.c.l.b16 %v274
    %v311 = vunpack.c.l.b16 %v275
    %v312 = vunpack.c.l.b16 %v276
    %v313 = vunpack.c.l.b16 %v277
    %v314 = vunpack.c.l.b16 %v278
    %v315 = vunpack.c.l.b16 %v279
    %v316 = vunpack.c.l.b16 %v280
    %v317 = vunpack.c.l.b16 %v281
    %v318 = vunpack.c.l.b16 %v282
    %v319 = vunpack.c.l.b16 %v283
    %v320 = vunpack.c.l.b16 %v284
    %v321 = vunpack.c.l.b16 %v285
    %v322 = vpack.c.b16 %v307, %v306
    %v323 = vpack.c.b16 %v309, %v308
    %v324 = vpack.c.b16 %v311, %v310
    %v325 = vpack.c.b16 %v313, %v312
    %v326 = vpack.c.b16 %v315, %v314
    %v327 = vpack.c.b16 %v317, %v316
    %v328 = vpack.c.b16 %v319, %v318
    %v329 = vpack.c.b16 %v321, %v320
    %338 = vmatpush.bf16.msra.mxu0 %v329
    %339 = vmatpush.bf16.msra.mxu0 %v328
    %340 = vmatpush.bf16.msra.mxu0 %v327
    %341 = vmatpush.bf16.msra.mxu0 %v326
    %342 = vmatpush.bf16.msra.mxu0 %v325
    %343 = vmatpush.bf16.msra.mxu0 %v324
    %344 = vmatpush.bf16.msra.mxu0 %v323
    %345 = vmatpush.bf16.msra.mxu0 %v322
    %346 = vmatmul.bf16.gmra.mxu0 %v269
    %v347 = vpop.f32.mrf.mxu0
    %v348 = vadd.f32 %v288, %v347
    %v349 = vpop.f32.mrf.mxu0
    %350 = vdwg.mxu0
    %vm351 = vcmask 130048
    %352 = vst.msk [vmem:[#allocation5] sm:$0xff] %vm351, %v348
    // Predicated region
    $region34: #{mlp_forward.1} parent=1 // pred_check
      _
    $region35: #{mlp_forward.1} parent=1 // pred_check_branch
      %354 = sbr.rel (0) target = $region37
    $region36: #{mlp_forward.1} parent=1 // pred_region
      %356 = vsyncadd [#allocation4], 0
      %s358 = sshll.u32 [#allocation5], 4
      %s359 = int_to_ptr.vmem [resolvable:$true] %s358
      %s360 = sshll.u32 %s7, 4
      %s361 = int_to_ptr.hbm [resolvable:$true] %s360
      %363 = dma.vmem_to_hbm [thread:$0]  %s359, 128, %s361, [#allocation4]
    $region37: #{mlp_forward.1} parent=1 // pred_fallthru
      _
    // Predicated region
    $region38: #{mlp_forward.1} parent=1 // pred_check
      _
    $region39: #{mlp_forward.1} parent=1 // pred_check_branch
      %365 = sbr.rel (0) target = $region41
    $region40: #{mlp_forward.1} parent=1 // pred_region
      %367 = dma.done [#allocation4], 128
    $region41: #{mlp_forward.1} parent=1 // pred_fallthru
      _
    %368 = vsyncpa [#allocation3], 1
    %369 = vsyncpa [#allocation4], 1

</llo_original>
